<compile_context>
chip_gen: v6e
topology: v6e:2x2x1
jax: 0.10.0
libtpu: 0.0.40
codegen_flags: <defaults>
</compile_context>

<pallas_src>
import functools

import jax
import jax.numpy as jnp
from jax import lax
from jax.experimental import pallas as pl
from jax.experimental.pallas import tpu as pltpu


def _round_up(x, m):
    return ((x + m - 1) // m) * m


def _vmem_limit_bytes():
    """Per-generation scoped-VMEM budget (v7x has 64 MiB physical vs 128 MiB)."""
    cap = 128 * 1024 * 1024
    try:
        cap = int(pltpu.get_tpu_info().vmem_capacity_bytes)
    except Exception:
        pass
    return int(min(cap * 3 // 4, 96 * 1024 * 1024))


def _pick_row_tile(m, cap_rows, min_steps=2):
    """Row tile: multiple of 8, <= cap_rows, and (when possible) splitting m
    into >= min_steps grid steps so both v7x TensorCores get work."""
    m8 = _round_up(max(m, 8), 8)
    cap = max(8, (cap_rows // 8) * 8)
    t = _round_up(max((m8 + min_steps - 1) // min_steps, 8), 8)
    t = min(t, cap, m8)
    mp = _round_up(m8, t)
    return t, mp


# ------------------------------ Pallas kernels ------------------------------

def _down_up_matmul_kernel(p_ref, wd_ref, wu_ref, o_ref):
    """Fused down+up matmuls for one M-tile.

    p_ref  : [TM, 16*nf]  bf16  im2col patches of LeakyReLU(x) (lane-dense K)
    wd_ref : [16*nf, ni]  bf16  Conv2d weight as a matrix
    wu_ref : [ni, 16*nf]  bf16  ConvTranspose2d weight as (kh,kw,cout) columns
    o_ref  : [TM, 16*nf]  bf16  per-input-position transposed-conv contributions
    """
    d = jnp.dot(p_ref[...], wd_ref[...], preferred_element_type=jnp.float32)
    u = jnp.maximum(d, 0.0).astype(wu_ref.dtype)            # uprelu, back to bf16
    o_ref[...] = jnp.dot(u, wu_ref[...],
                         preferred_element_type=jnp.float32).astype(o_ref.dtype)


def _row_stats_kernel(t_ref, sum_ref, sq_ref):
    """Lane-dense per-row (per batch*channel) sum and sum-of-squares.

    t_ref   : [TR, H*W] f32 channel-major rows
    sum_ref : [TR, 1]   f32
    sq_ref  : [TR, 1]   f32
    """
    t = t_ref[...]
    sum_ref[...] = jnp.sum(t, axis=1, keepdims=True)
    sq_ref[...] = jnp.sum(t * t, axis=1, keepdims=True)


def _bn_norm_concat_nchw_kernel(nf, x_ref, t_ref, scale_ref, shift_ref, o_ref):
    """Folded BatchNorm + channel concat, emitted directly in NCHW layout.

    x_ref     : [nf,   H*W] f32  one batch image of x, channel-major
    t_ref     : [nf,   H*W] f32  one batch image of t, channel-major
    scale_ref : [nf, 1] f32      gamma * rsqrt(var+eps)
    shift_ref : [nf, 1] f32      beta - mean*scale
    o_ref     : [2*nf, H*W] f32  rows [0,nf): x copy, rows [nf,2nf): BN(t)
    """
    o_ref[:nf, :] = x_ref[...]
    o_ref[nf:, :] = t_ref[...] * scale_ref[...] + shift_ref[...]


# --------------------------------- JAX glue ---------------------------------

def _im2col(x_nhwc, k, stride, ho, wo):
    """[B, Hp, Wp, C] -> [B*ho*wo, k*k*C]; column order is (kh, kw, c)."""
    cols = []
    for kh in range(k):
        for kw in range(k):
            cols.append(x_nhwc[:, kh:kh + stride * (ho - 1) + 1:stride,
                               kw:kw + stride * (wo - 1) + 1:stride, :])
    patches = jnp.concatenate(cols, axis=-1)                # [B, ho, wo, k*k*C]
    b = x_nhwc.shape[0]
    c = x_nhwc.shape[-1]
    return patches.reshape(b * ho * wo, k * k * c)


def _col2im_stride2_k4(t_cols, B, ho, wo, nf):
    """Overlap-add (col2im) for ConvTranspose2d(kernel=4, stride=2, padding=1).

    t_cols : [B*ho*wo, 16*nf] (bf16 ok; upcast to f32 here), columns ordered
             (kh, kw, cout); t_cols[(b,i,j), kh, kw, co] contributes to output
             position (2i-1+kh, 2j-1+kw).  Pads + interleave reshapes only.
    Returns t : [B, 2*ho, 2*wo, nf] f32.
    """
    c = t_cols.astype(jnp.float32).reshape(B, ho, wo, 4, 4, nf)

    # rows: full row index 2*i' + r gets c[i', kh=r] + c[i'-1, kh=r+2]
    lo = ((0, 0), (0, 1), (0, 0), (0, 0), (0, 0))
    hi = ((0, 0), (1, 0), (0, 0), (0, 0), (0, 0))
    rows = [jnp.pad(c[:, :, :, r, :, :], lo) + jnp.pad(c[:, :, :, r + 2, :, :], hi)
            for r in (0, 1)]
    t_rows = jnp.stack(rows, axis=2).reshape(B, 2 * (ho + 1), wo, 4, nf)

    # cols: full col index 2*j' + s gets t_rows[j', kw=s] + t_rows[j'-1, kw=s+2]
    lo = ((0, 0), (0, 0), (0, 1), (0, 0))
    hi = ((0, 0), (0, 0), (1, 0), (0, 0))
    cols = [jnp.pad(t_rows[:, :, :, s, :], lo) + jnp.pad(t_rows[:, :, :, s + 2, :], hi)
            for s in (0, 1)]
    t_full = jnp.stack(cols, axis=3).reshape(B, 2 * (ho + 1), 2 * (wo + 1), nf)

    # transposed-conv padding=1 crops one border row/col on each side
    return t_full[:, 1:1 + 2 * ho, 1:1 + 2 * wo, :]


def unet_block_innermost_forward(x_nchw, w_down, w_up_t, gamma, beta):
    """UnetBlock(nf, ni, innermost=True).forward(x) == cat([x, model(x)], 1).

    x_nchw : [B, nf, H, W]    f32
    w_down : [ni, nf, 4, 4]   (PyTorch Conv2d weight,         OIHW)
    w_up_t : [ni, nf, 4, 4]   (PyTorch ConvTranspose2d weight, I O H W)
    gamma, beta : [nf]        (BatchNorm2d affine params)
    """
    B, C, H, W = x_nchw.shape
    ni = w_down.shape[0]
    nf = w_up_t.shape[1]
    assert C == nf                       # input_c defaults to nf
    assert nf % 8 == 0, "channel-major tiling assumes nf is a multiple of 8"
    assert H % 2 == 0 and W % 2 == 0

    ho, wo = H // 2, W // 2
    HW = H * W
    M1 = B * ho * wo                     # down-path rows (= up-path input rows)
    K1 = 16 * C                          # im2col width for the 4x4 down conv
    K2 = 16 * nf                         # (kh, kw, cout) columns of the up conv
    vmem_limit = _vmem_limit_bytes()

    # ---- prep (XLA glue): LeakyReLU once, pad, im2col patches in bf16 -------
    # LeakyReLU(0.2) applied ONCE on x (leaky(0)=0, so zero padding is
    # preserved and we avoid re-applying it on the 4x-replicated patches).
    # TODO(synk): fuse this im2col gather into pass 1 to avoid the 4x patch
    #             matrix round-trip through HBM.
    x_nhwc = jnp.transpose(x_nchw, (0, 2, 3, 1))
    xl = jnp.where(x_nhwc > 0, x_nhwc, 0.2 * x_nhwc)
    x_pad = jnp.pad(xl, ((0, 0), (1, 1), (1, 1), (0, 0)))
    p_down = _im2col(x_pad, 4, 2, ho, wo).astype(jnp.bfloat16)        # [M1, K1]

    w_down_mat = jnp.transpose(w_down, (2, 3, 1, 0)).reshape(K1, ni).astype(jnp.bfloat16)
    # t_cols[(b,i,j), kh, kw, co] = sum_ci u[(b,i,j), ci] * w_up_t[ci, co, kh, kw]
    w_up_mat = jnp.transpose(w_up_t, (0, 2, 3, 1)).reshape(ni, K2).astype(jnp.bfloat16)

    # ---- pass 1: fused down conv (+ReLU) and transposed-conv matmul ---------
    TM1, M1p = _pick_row_tile(M1, 4096)
    if M1p != M1:                        # pad only when not already tile-aligned
        p_down = jnp.pad(p_down, ((0, M1p - M1), (0, 0)))
    t_cols = pl.pallas_call(
        _down_up_matmul_kernel,
        grid=(M1p // TM1,),
        in_specs=[pl.BlockSpec((TM1, K1), lambda i: (i, 0)),
                  pl.BlockSpec((K1, ni), lambda i: (0, 0)),
                  pl.BlockSpec((ni, K2), lambda i: (0, 0))],
        out_specs=pl.BlockSpec((TM1, K2), lambda i: (i, 0)),
        out_shape=jax.ShapeDtypeStruct((M1p, K2), jnp.bfloat16),
        compiler_params=pltpu.CompilerParams(
            dimension_semantics=("parallel",),
            vmem_limit_bytes=vmem_limit),
    )(p_down, w_down_mat, w_up_mat)
    if M1p != M1:
        t_cols = t_cols[:M1]

    # ---- col2im overlap-add (XLA glue, f32 accumulation), channel-major -----
    t_nhwc = _col2im_stride2_k4(t_cols, B, ho, wo, nf)        # [B, H, W, nf] f32
    t_cm = jnp.transpose(t_nhwc, (0, 3, 1, 2)).reshape(B * nf, HW)

    # ---- pass 2: lane-dense per-(b, c) row sums / sums of squares -----------
    R = B * nf
    cap_rows = max(8, (4 * 1024 * 1024 // (4 * HW)) // 8 * 8)   # ~4 MiB / block
    TR, Rp = _pick_row_tile(R, cap_rows)
    t_cm_p = jnp.pad(t_cm, ((0, Rp - R), (0, 0))) if Rp != R else t_cm
    rsum, rsq = pl.pallas_call(
        _row_stats_kernel,
        grid=(Rp // TR,),
        in_specs=[pl.BlockSpec((TR, HW), lambda i: (i, 0))],
        out_specs=(pl.BlockSpec((TR, 1), lambda i: (i, 0)),
                   pl.BlockSpec((TR, 1), lambda i: (i, 0))),
        out_shape=(jax.ShapeDtypeStruct((Rp, 1), jnp.float32),
                   jax.ShapeDtypeStruct((Rp, 1), jnp.float32)),
        compiler_params=pltpu.CompilerParams(
            dimension_semantics=("parallel",),
            vmem_limit_bytes=vmem_limit),
    )(t_cm_p)

    # fold mean/var/gamma/beta into per-channel scale/shift (tiny [nf] math)
    n = B * HW
    csum = rsum[:R].reshape(B, nf).sum(axis=0)
    csq = rsq[:R].reshape(B, nf).sum(axis=0)
    mean = csum / n
    var = jnp.maximum(csq / n - mean * mean, 0.0)   # clamp: cancellation guard
    inv = lax.rsqrt(var + 1e-5)
    scale = (gamma * inv).reshape(nf, 1).astype(jnp.float32)
    shift = (beta - mean * gamma * inv).reshape(nf, 1).astype(jnp.float32)

    # ---- pass 3: normalize + channel concat, emitted directly as NCHW -------
    x_cm = x_nchw.reshape(B * nf, HW)               # already channel-major
    out_cm = pl.pallas_call(
        functools.partial(_bn_norm_concat_nchw_kernel, nf),
        grid=(B,),
        in_specs=[pl.BlockSpec((nf, HW), lambda b: (b, 0)),
                  pl.BlockSpec((nf, HW), lambda b: (b, 0)),
                  pl.BlockSpec((nf, 1), lambda b: (0, 0)),
                  pl.BlockSpec((nf, 1), lambda b: (0, 0))],
        out_specs=pl.BlockSpec((2 * nf, HW), lambda b: (b, 0)),
        out_shape=jax.ShapeDtypeStruct((B * 2 * nf, HW), jnp.float32),
        compiler_params=pltpu.CompilerParams(
            dimension_semantics=("parallel",),
            vmem_limit_bytes=vmem_limit),
    )(x_cm, t_cm, scale, shift)

    # no trailing transpose: rows are already (batch, [x-channels, y-channels])
    return out_cm.reshape(B, 2 * nf, H, W)


# ----------------------------- pure-JAX reference ---------------------------

def _reference(x_nchw, w_down, w_up_t, gamma, beta):
    h = jnp.where(x_nchw > 0, x_nchw, 0.2 * x_nchw)
    d = lax.conv_general_dilated(h, w_down, (2, 2), ((1, 1), (1, 1)),
                                 dimension_numbers=('NCHW', 'OIHW', 'NCHW'))
    u = jnp.maximum(d, 0.0)
    w_conv = jnp.transpose(w_up_t, (1, 0, 2, 3))[:, :, ::-1, ::-1]
    t = lax.conv_general_dilated(u, w_conv, (1, 1), ((2, 2), (2, 2)),
                                 lhs_dilation=(2, 2),
                                 dimension_numbers=('NCHW', 'OIHW', 'NCHW'))
    mean = jnp.mean(t, axis=(0, 2, 3), keepdims=True)
    var = jnp.mean((t - mean) ** 2, axis=(0, 2, 3), keepdims=True)
    y = ((t - mean) * lax.rsqrt(var + 1e-5) * gamma.reshape(1, -1, 1, 1)
         + beta.reshape(1, -1, 1, 1))
    return jnp.concatenate([x_nchw, y], axis=1)


if __name__ == "__main__":
    B, nf, ni, H, W = 2, 8, 16, 16, 16
    key = jax.random.PRNGKey(0)
    kx, kd, ku, kg, kb = jax.random.split(key, 5)

    x = jax.random.normal(kx, (B, nf, H, W), jnp.float32)
    w_down = 0.1 * jax.random.normal(kd, (ni, nf, 4, 4), jnp.float32)   # Conv2d(nf -> ni)
    w_up_t = 0.1 * jax.random.normal(ku, (ni, nf, 4, 4), jnp.float32)   # ConvT(ni -> nf)
    gamma = 1.0 + 0.1 * jax.random.normal(kg, (nf,), jnp.float32)       # BN weight
    beta = 0.1 * jax.random.normal(kb, (nf,), jnp.float32)              # BN bias

    fwd = jax.jit(unet_block_innermost_forward)
    out = jax.block_until_ready(fwd(x, w_down, w_up_t, gamma, beta))
    ref = _reference(x, w_down, w_up_t, gamma, beta)

    assert out.shape == (B, 2 * nf, H, W), out.shape
    max_err = float(jnp.max(jnp.abs(out - ref)))
    # matmuls run with bf16 operands and t_cols is stored in bf16 (f32 MXU
    # accumulation + f32 col2im), hence the tolerance margin
    assert bool(jnp.allclose(out, ref, rtol=3e-2, atol=3e-2)), max_err
    print("KERNEL_OK")
</pallas_src>

<mosaic_0001>
module attributes {stable_mosaic.version = 11 : i64} {
  func.func @_down_up_matmul_kernel(%arg0: i32, %arg1: memref<64x128xbf16, #tpu.memory_space<vmem>>, %arg2: memref<128x16xbf16, #tpu.memory_space<vmem>>, %arg3: memref<16x128xbf16, #tpu.memory_space<vmem>>, %arg4: memref<64x128xbf16, #tpu.memory_space<vmem>>) attributes {dimension_semantics = [#tpu.dimension_semantics<parallel>], iteration_bounds = array<i64: 2>, scalar_prefetch = 0 : i64, scratch_operands = 0 : i64, tpu.core_type = #tpu.core_type<tc>, window_params = [{transform_indices = @transform_0, window_bounds = array<i64: 64, 128>}, {pipeline_mode = #tpu.pipeline_mode<synchronous>, transform_indices = @transform_1, window_bounds = array<i64: 128, 16>}, {pipeline_mode = #tpu.pipeline_mode<synchronous>, transform_indices = @transform_2, window_bounds = array<i64: 16, 128>}, {transform_indices = @transform_3, window_bounds = array<i64: 64, 128>}]} {
    %c0 = arith.constant 0 : index
    %c0_0 = arith.constant 0 : index
    %0 = vector.load %arg1[%c0, %c0_0] : memref<64x128xbf16, #tpu.memory_space<vmem>>, vector<64x128xbf16>
    %c0_1 = arith.constant 0 : index
    %c0_2 = arith.constant 0 : index
    %1 = vector.load %arg2[%c0_1, %c0_2] : memref<128x16xbf16, #tpu.memory_space<vmem>>, vector<128x16xbf16>
    %cst = arith.constant dense<0.000000e+00> : vector<64x16xf32>
    %2 = tpu.matmul %0, %1, %cst {dimension_numbers = #tpu.dot_dimension_numbers<[1], [0], [0], [1], [0, 0, 1, 1], [], []>} : vector<64x128xbf16>, vector<128x16xbf16>, vector<64x16xf32> -> vector<64x16xf32>
    %cst_3 = arith.constant 0.000000e+00 : f32
    %3 = vector.broadcast %cst_3 : f32 to vector<64x16xf32>
    %4 = arith.maximumf %2, %3 : vector<64x16xf32>
    %5 = arith.truncf %4 : vector<64x16xf32> to vector<64x16xbf16>
    %c0_4 = arith.constant 0 : index
    %c0_5 = arith.constant 0 : index
    %6 = vector.load %arg3[%c0_4, %c0_5] : memref<16x128xbf16, #tpu.memory_space<vmem>>, vector<16x128xbf16>
    %cst_6 = arith.constant dense<0.000000e+00> : vector<64x128xf32>
    %7 = tpu.matmul %5, %6, %cst_6 {dimension_numbers = #tpu.dot_dimension_numbers<[1], [0], [0], [1], [0, 0, 1, 1], [], []>} : vector<64x16xbf16>, vector<16x128xbf16>, vector<64x128xf32> -> vector<64x128xf32>
    %8 = arith.truncf %7 : vector<64x128xf32> to vector<64x128xbf16>
    %c0_7 = arith.constant 0 : index
    %c0_8 = arith.constant 0 : index
    %9 = vector.load %arg4[%c0_7, %c0_8] : memref<64x128xbf16, #tpu.memory_space<vmem>>, vector<64x128xbf16>
    tpu.vector_store %arg4[%c0_7, %c0_8], %8 {strides = array<i32>} : memref<64x128xbf16, #tpu.memory_space<vmem>>, vector<64x128xbf16>,
    return
  }
  func.func @transform_0(%arg0: i32) -> (i32, i32) {
    %c0_i32 = arith.constant 0 : i32
    %c0_i32_0 = arith.constant 0 : i32
    return %arg0, %c0_i32 : i32, i32
  }
  func.func @transform_1(%arg0: i32) -> (i32, i32) {
    %c0_i32 = arith.constant 0 : i32
    %c0_i32_0 = arith.constant 0 : i32
    %c0_i32_1 = arith.constant 0 : i32
    return %c0_i32, %c0_i32_0 : i32, i32
  }
  func.func @transform_2(%arg0: i32) -> (i32, i32) {
    %c0_i32 = arith.constant 0 : i32
    %c0_i32_0 = arith.constant 0 : i32
    %c0_i32_1 = arith.constant 0 : i32
    return %c0_i32, %c0_i32_0 : i32, i32
  }
  func.func @transform_3(%arg0: i32) -> (i32, i32) {
    %c0_i32 = arith.constant 0 : i32
    %c0_i32_0 = arith.constant 0 : i32
    return %arg0, %c0_i32 : i32, i32
  }
}

module attributes {stable_mosaic.version = 11 : i64} {
  func.func @_row_stats_kernel(%arg0: i32, %arg1: memref<8x256xf32, #tpu.memory_space<vmem>>, %arg2: memref<8x1xf32, #tpu.memory_space<vmem>>, %arg3: memref<8x1xf32, #tpu.memory_space<vmem>>) attributes {dimension_semantics = [#tpu.dimension_semantics<parallel>], iteration_bounds = array<i64: 2>, scalar_prefetch = 0 : i64, scratch_operands = 0 : i64, tpu.core_type = #tpu.core_type<tc>, window_params = [{transform_indices = @transform_0, window_bounds = array<i64: 8, 256>}, {transform_indices = @transform_1, window_bounds = array<i64: 8, 1>}, {transform_indices = @transform_2, window_bounds = array<i64: 8, 1>}]} {
    %c0 = arith.constant 0 : index
    %c0_0 = arith.constant 0 : index
    %0 = vector.load %arg1[%c0, %c0_0] : memref<8x256xf32, #tpu.memory_space<vmem>>, vector<8x256xf32>
    %cst = arith.constant dense<0.000000e+00> : vector<8xf32>
    %1 = vector.multi_reduction <add>, %0, %cst [1] : vector<8x256xf32> to vector<8xf32>
    %2 = vector.shape_cast %1 : vector<8xf32> to vector<8x1xf32>
    %c0_1 = arith.constant 0 : index
    %c0_2 = arith.constant 0 : index
    %3 = vector.load %arg2[%c0_1, %c0_2] : memref<8x1xf32, #tpu.memory_space<vmem>>, vector<8x1xf32>
    tpu.vector_store %arg2[%c0_1, %c0_2], %2 {strides = array<i32>} : memref<8x1xf32, #tpu.memory_space<vmem>>, vector<8x1xf32>,
    %4 = arith.mulf %0, %0 : vector<8x256xf32>
    %cst_3 = arith.constant dense<0.000000e+00> : vector<8xf32>
    %5 = vector.multi_reduction <add>, %4, %cst_3 [1] : vector<8x256xf32> to vector<8xf32>
    %6 = vector.shape_cast %5 : vector<8xf32> to vector<8x1xf32>
    %c0_4 = arith.constant 0 : index
    %c0_5 = arith.constant 0 : index
    %7 = vector.load %arg3[%c0_4, %c0_5] : memref<8x1xf32, #tpu.memory_space<vmem>>, vector<8x1xf32>
    tpu.vector_store %arg3[%c0_4, %c0_5], %6 {strides = array<i32>} : memref<8x1xf32, #tpu.memory_space<vmem>>, vector<8x1xf32>,
    return
  }
  func.func @transform_0(%arg0: i32) -> (i32, i32) {
    %c0_i32 = arith.constant 0 : i32
    %c0_i32_0 = arith.constant 0 : i32
    return %arg0, %c0_i32 : i32, i32
  }
  func.func @transform_1(%arg0: i32) -> (i32, i32) {
    %c0_i32 = arith.constant 0 : i32
    %c0_i32_0 = arith.constant 0 : i32
    return %arg0, %c0_i32 : i32, i32
  }
  func.func @transform_2(%arg0: i32) -> (i32, i32) {
    %c0_i32 = arith.constant 0 : i32
    %c0_i32_0 = arith.constant 0 : i32
    return %arg0, %c0_i32 : i32, i32
  }
}

module attributes {stable_mosaic.version = 11 : i64} {
  func.func @_bn_norm_concat_nchw_kernel(%arg0: i32, %arg1: memref<8x256xf32, #tpu.memory_space<vmem>>, %arg2: memref<8x256xf32, #tpu.memory_space<vmem>>, %arg3: memref<8x1xf32, #tpu.memory_space<vmem>>, %arg4: memref<8x1xf32, #tpu.memory_space<vmem>>, %arg5: memref<16x256xf32, #tpu.memory_space<vmem>>) attributes {dimension_semantics = [#tpu.dimension_semantics<parallel>], iteration_bounds = array<i64: 2>, scalar_prefetch = 0 : i64, scratch_operands = 0 : i64, tpu.core_type = #tpu.core_type<tc>, window_params = [{transform_indices = @transform_0, window_bounds = array<i64: 8, 256>}, {transform_indices = @transform_1, window_bounds = array<i64: 8, 256>}, {pipeline_mode = #tpu.pipeline_mode<synchronous>, transform_indices = @transform_2, window_bounds = array<i64: 8, 1>}, {pipeline_mode = #tpu.pipeline_mode<synchronous>, transform_indices = @transform_3, window_bounds = array<i64: 8, 1>}, {transform_indices = @transform_4, window_bounds = array<i64: 16, 256>}]} {
    %c0 = arith.constant 0 : index
    %c0_0 = arith.constant 0 : index
    %0 = vector.load %arg1[%c0, %c0_0] : memref<8x256xf32, #tpu.memory_space<vmem>>, vector<8x256xf32>
    %c0_1 = arith.constant 0 : index
    %c0_2 = arith.constant 0 : index
    %1 = vector.load %arg5[%c0_1, %c0_2] : memref<16x256xf32, #tpu.memory_space<vmem>>, vector<8x256xf32>
    tpu.vector_store %arg5[%c0_1, %c0_2], %0 {strides = array<i32>} : memref<16x256xf32, #tpu.memory_space<vmem>>, vector<8x256xf32>,
    %c0_3 = arith.constant 0 : index
    %c0_4 = arith.constant 0 : index
    %2 = vector.load %arg2[%c0_3, %c0_4] : memref<8x256xf32, #tpu.memory_space<vmem>>, vector<8x256xf32>
    %c0_5 = arith.constant 0 : index
    %c0_6 = arith.constant 0 : index
    %3 = vector.load %arg3[%c0_5, %c0_6] : memref<8x1xf32, #tpu.memory_space<vmem>>, vector<8x1xf32>
    %4 = vector.broadcast %3 : vector<8x1xf32> to vector<8x256xf32>
    %5 = arith.mulf %2, %4 : vector<8x256xf32>
    %c0_7 = arith.constant 0 : index
    %c0_8 = arith.constant 0 : index
    %6 = vector.load %arg4[%c0_7, %c0_8] : memref<8x1xf32, #tpu.memory_space<vmem>>, vector<8x1xf32>
    %7 = vector.broadcast %6 : vector<8x1xf32> to vector<8x256xf32>
    %8 = arith.addf %5, %7 : vector<8x256xf32>
    %c8 = arith.constant 8 : index
    %c0_9 = arith.constant 0 : index
    %9 = vector.load %arg5[%c8, %c0_9] : memref<16x256xf32, #tpu.memory_space<vmem>>, vector<8x256xf32>
    tpu.vector_store %arg5[%c8, %c0_9], %8 {strides = array<i32>} : memref<16x256xf32, #tpu.memory_space<vmem>>, vector<8x256xf32>,
    return
  }
  func.func @transform_0(%arg0: i32) -> (i32, i32) {
    %c0_i32 = arith.constant 0 : i32
    %c0_i32_0 = arith.constant 0 : i32
    return %arg0, %c0_i32 : i32, i32
  }
  func.func @transform_1(%arg0: i32) -> (i32, i32) {
    %c0_i32 = arith.constant 0 : i32
    %c0_i32_0 = arith.constant 0 : i32
    return %arg0, %c0_i32 : i32, i32
  }
  func.func @transform_2(%arg0: i32) -> (i32, i32) {
    %c0_i32 = arith.constant 0 : i32
    %c0_i32_0 = arith.constant 0 : i32
    %c0_i32_1 = arith.constant 0 : i32
    return %c0_i32, %c0_i32_0 : i32, i32
  }
  func.func @transform_3(%arg0: i32) -> (i32, i32) {
    %c0_i32 = arith.constant 0 : i32
    %c0_i32_0 = arith.constant 0 : i32
    %c0_i32_1 = arith.constant 0 : i32
    return %c0_i32, %c0_i32_0 : i32, i32
  }
  func.func @transform_4(%arg0: i32) -> (i32, i32) {
    %c0_i32 = arith.constant 0 : i32
    %c0_i32_0 = arith.constant 0 : i32
    return %arg0, %c0_i32 : i32, i32
  }
}

</mosaic_0001>

<llo_original>
// kernel: unet_block_innermost_forward.3
$region0: #{unet_block_innermost_forward.3}
  #allocation0 [shape = 'u32[]', space=smem, size = 0x4, offset = 0x4, fixed_abs, tag = 'smem constant byte address 0x4 - core index']
  #allocation1 [shape = 'u32[144,128]{1,0:T(1,128)}', space=vmem, size = 0x12000, scoped, tag = 'internal scratch']
  %s0 = inlined_call_operand.vmem [shape: bf16[128,128], index: 0, kind: input, shape index: {}]
  %s1 = inlined_call_operand.vmem [shape: bf16[128,16], index: 1, kind: input, shape index: {}]
  %s2 = inlined_call_operand.vmem [shape: bf16[16,128], index: 2, kind: input, shape index: {}]
  %s3 = inlined_call_operand.vmem [shape: bf16[128,128], index: 3, kind: output, shape index: {}]
  %s4 = sld [smem:[#allocation0]]
  $region45: #{unet_block_innermost_forward.3} parent=0
    _
  %s6 = ssub.s32 1, %s4
  %s7 = scalar_select 0, %s6, %s4
  loop: start=0, step=1, limit=4
  $region2: #{unet_block_innermost_forward.3} parent=0 // loop_pre_header
    _
  $region3: #{unet_block_innermost_forward.3} parent=0 // loop_header
    %s9 = sphi 0, %s13
    %p10 = scmp.ge.s32.totalorder %s9, 4
    %s19 = sphi 0, %s21
    %s22 = sphi 0, %s19
    %s23 = sphi 0, %s22
    %s39 = sphi 0, %s23
    %s43 = sphi 0, %s43
    %s45 = sphi 0, %s43
    %s46 = sphi 0, %s45
    %s60 = sphi 0, %s46
    %s64 = sphi 0, %s64
    %s66 = sphi 0, %s64
    %s67 = sphi 0, %s66
    %s81 = sphi 0, %s67
    %s87 = sphi 0, %s89
    %s90 = sphi 0, %s87
    %s91 = sphi 0, %s90
    %s107 = sphi 0, %s91
  $region4: #{unet_block_innermost_forward.3} parent=0 // loop_header_branch
    %12 = sbr.rel (%p10) target = $region8
  $region5: #{unet_block_innermost_forward.3} parent=0 // loop_body
    %s14 = ssub.s32 %s9, 1
    %s15 = ssub.s32 %s9, 2
    %s16 = sadd.s32 %s9, 1
    %s17 = ssub.s32 %s9, %s16
    %p18 = scmp.eq.s32.totalorder %s17, 0
    %s20 = sadd.s32 %s19, 1
    %s21 = scalar_select %p18, %s19, %s20
    %p24 = pneg %p18
    %p25 = scmp.eq.s32.totalorder %s9, 1
    %p26 = por %p24, %p25
    %p27 = scmp.ne.s32.totalorder %s19, %s22
    %p28 = scmp.eq.s32.totalorder %s9, 0
    %p29 = por %p27, %p28
    %p30 = scmp.ne.s32.totalorder %s19, %s22
    %p31 = scmp.eq.s32.totalorder %s14, 1
    %p32 = por %p30, %p31
    %p33 = scmp.ne.s32.totalorder %s22, %s23
    %p34 = scmp.eq.s32.totalorder %s14, 0
    %p35 = por %p33, %p34
    %p36 = scmp.ne.s32.totalorder %s22, %s23
    %p37 = scmp.eq.s32.totalorder %s15, 1
    %p38 = por %p36, %p37
    %p40 = scmp.ne.s32.totalorder %s23, %s39
    %p41 = scmp.eq.s32.totalorder %s15, 0
    %p42 = por %p40, %p41
    %s44 = sadd.s32 %s43, 1
    %p47 = scmp.eq.s32.totalorder %s9, 1
    %p48 = scmp.ne.s32.totalorder %s43, %s45
    %p49 = scmp.eq.s32.totalorder %s9, 0
    %p50 = por %p48, %p49
    %p51 = scmp.ne.s32.totalorder %s43, %s45
    %p52 = scmp.eq.s32.totalorder %s14, 1
    %p53 = por %p51, %p52
    %p54 = scmp.ne.s32.totalorder %s45, %s46
    %p55 = scmp.eq.s32.totalorder %s14, 0
    %p56 = por %p54, %p55
    %p57 = scmp.ne.s32.totalorder %s45, %s46
    %p58 = scmp.eq.s32.totalorder %s15, 1
    %p59 = por %p57, %p58
    %p61 = scmp.ne.s32.totalorder %s46, %s60
    %p62 = scmp.eq.s32.totalorder %s15, 0
    %p63 = por %p61, %p62
    %s65 = sadd.s32 %s64, 1
    %p68 = scmp.eq.s32.totalorder %s9, 1
    %p69 = scmp.ne.s32.totalorder %s64, %s66
    %p70 = scmp.eq.s32.totalorder %s9, 0
    %p71 = por %p69, %p70
    %p72 = scmp.ne.s32.totalorder %s64, %s66
    %p73 = scmp.eq.s32.totalorder %s14, 1
    %p74 = por %p72, %p73
    %p75 = scmp.ne.s32.totalorder %s66, %s67
    %p76 = scmp.eq.s32.totalorder %s14, 0
    %p77 = por %p75, %p76
    %p78 = scmp.ne.s32.totalorder %s66, %s67
    %p79 = scmp.eq.s32.totalorder %s15, 1
    %p80 = por %p78, %p79
    %p82 = scmp.ne.s32.totalorder %s67, %s81
    %p83 = scmp.eq.s32.totalorder %s15, 0
    %p84 = por %p82, %p83
    %s85 = ssub.s32 %s9, %s16
    %p86 = scmp.eq.s32.totalorder %s85, 0
    %s88 = sadd.s32 %s87, 1
    %s89 = scalar_select %p86, %s87, %s88
    %p92 = pneg %p86
    %p93 = scmp.eq.s32.totalorder %s9, 1
    %p94 = por %p92, %p93
    %p95 = scmp.ne.s32.totalorder %s87, %s90
    %p96 = scmp.eq.s32.totalorder %s9, 0
    %p97 = por %p95, %p96
    %p98 = scmp.ne.s32.totalorder %s87, %s90
    %p99 = scmp.eq.s32.totalorder %s14, 1
    %p100 = por %p98, %p99
    %p101 = scmp.ne.s32.totalorder %s90, %s91
    %p102 = scmp.eq.s32.totalorder %s14, 0
    %p103 = por %p101, %p102
    %p104 = scmp.ne.s32.totalorder %s90, %s91
    %p105 = scmp.eq.s32.totalorder %s15, 1
    %p106 = por %p104, %p105
    %p108 = scmp.ne.s32.totalorder %s91, %s107
    %p109 = scmp.eq.s32.totalorder %s15, 0
    %p110 = por %p108, %p109
    %p111 = scmp.le.s32.totalorder 1, %s9
    %p112 = scmp.lt.s32.totalorder %s9, 3
    %p113 = pnand %p111, %p112
    %p114 = pneg %p113
    // Predicated region
    $region9: #{unet_block_innermost_forward.3} parent=5 // pred_check
      _
    $region10: #{unet_block_innermost_forward.3} parent=5 // pred_check_branch
      %116 = sbr.rel (%p113) target = $region12
    $region11: #{unet_block_innermost_forward.3} parent=5 // pred_region
      %s117 = ssub.s32 %s9, 1
      // Predicated region
      $region13: #{unet_block_innermost_forward.3} parent=11 // pred_check
        %p118 = pneg %p56
      $region14: #{unet_block_innermost_forward.3} parent=11 // pred_check_branch
        %120 = sbr.rel (%p118) target = $region16
      $region15: #{unet_block_innermost_forward.3} parent=11 // pred_region
        _
      $region16: #{unet_block_innermost_forward.3} parent=11 // pred_fallthru
        _
      // Predicated region
      $region17: #{unet_block_innermost_forward.3} parent=11 // pred_check
        %p121 = pneg %p77
      $region18: #{unet_block_innermost_forward.3} parent=11 // pred_check_branch
        %123 = sbr.rel (%p121) target = $region20
      $region19: #{unet_block_innermost_forward.3} parent=11 // pred_region
        _
      $region20: #{unet_block_innermost_forward.3} parent=11 // pred_fallthru
        _
    $region12: #{unet_block_innermost_forward.3} parent=5 // pred_fallthru
      _
    %p124 = scmp.lt.s32.totalorder %s9, 2
    // Predicated region
    $region21: #{unet_block_innermost_forward.3} parent=5 // pred_check
      %p125 = pneg %p124
    $region22: #{unet_block_innermost_forward.3} parent=5 // pred_check_branch
      %127 = sbr.rel (%p125) target = $region24
    $region23: #{unet_block_innermost_forward.3} parent=5 // pred_region
      // Predicated region
      $region25: #{unet_block_innermost_forward.3} parent=23 // pred_check
        %p128 = pneg %p29
      $region26: #{unet_block_innermost_forward.3} parent=23 // pred_check_branch
        %130 = sbr.rel (%p128) target = $region28
      $region27: #{unet_block_innermost_forward.3} parent=23 // pred_region
        %s131 = smul.u32 8, %s9
        %p132 = scmp.lt.s32.totalorder %s131, 15
        %s133 = scalar_select %p132, %s131, 15
        %s134 = smul.addr %s133, 4
        %s135 = scalar_lea.vmem %s0, %s134
        %s136 = smul.u32 8, %s9
      $region28: #{unet_block_innermost_forward.3} parent=23 // pred_fallthru
        _
    $region24: #{unet_block_innermost_forward.3} parent=5 // pred_fallthru
      _
    %p137 = scmp.le.s32.totalorder 1, %s9
    %p138 = scmp.lt.s32.totalorder %s9, 3
    %p139 = pnand %p137, %p138
    %p140 = pneg %p139
    // Predicated region
    $region29: #{unet_block_innermost_forward.3} parent=5 // pred_check
      _
    $region30: #{unet_block_innermost_forward.3} parent=5 // pred_check_branch
      %142 = sbr.rel (%p139) target = $region32
    $region31: #{unet_block_innermost_forward.3} parent=5 // pred_region
      %s143 = ssub.s32 %s9, 1
      %s144 = smul.u32 8, %s14
      %p145 = scmp.lt.s32.totalorder %s144, 15
      %s146 = scalar_select %p145, %s144, 15
      %s147 = smul.addr %s146, 4
      %s148 = scalar_lea.vmem %s0, %s147
      %p149 = pneg %p35
      %p150 = pneg %p32
      %p151 = pneg %p56
      %p152 = pneg %p53
      %p153 = pneg %p77
      %p154 = pneg %p74
      %p155 = pneg %p103
      %p156 = pneg %p100
      %s157 = smul.u32 8, %s14
      %p158 = scmp.lt.s32.totalorder %s157, 15
      %s159 = scalar_select %p158, %s157, 15
      %s160 = smul.addr %s159, 4
      %s161 = scalar_lea.vmem %s3, %s160
      %s162 = smul.u32 8, %s14
      %p163 = scmp.lt.s32.totalorder %s162, 15
      %s164 = scalar_select %p163, %s162, 15
      %s165 = smul.addr %s164, 4
      %s166 = scalar_lea.vmem %s0, %s165
      %s167 = smul.u32 8, %s14
      %s168 = smul.u32 8, %s14
      %p169 = scmp.lt.s32.totalorder %s168, 15
      %s170 = scalar_select %p169, %s168, 15
      %s171 = smul.addr %s170, 4
      %s172 = scalar_lea.vmem %s3, %s171
      %s173 = smul.u32 8, %s14
      %v175 = vld [vmem:[%s166] sm:$0xf]
      %v176 = vld [vmem:[%s166 + $0x4] sm:$0xf]
      %v177 = vld [vmem:[%s166 + $0x8] sm:$0xf]
      %v178 = vld [vmem:[%s166 + $0xc] sm:$0xf]
      %v179 = vld [vmem:[%s166 + $0x10] sm:$0xf]
      %v180 = vld [vmem:[%s166 + $0x14] sm:$0xf]
      %v181 = vld [vmem:[%s166 + $0x18] sm:$0xf]
      %v182 = vld [vmem:[%s166 + $0x1c] sm:$0xf]
      %v183 = vld [vmem:[%s1] sm:$0xf]
      %v184 = vld [vmem:[%s1 + $0x4] sm:$0xf]
      %v185 = vld [vmem:[%s1 + $0x8] sm:$0xf]
      %v186 = vld [vmem:[%s1 + $0xc] sm:$0xf]
      %v187 = vld [vmem:[%s1 + $0x10] sm:$0xf]
      %v188 = vld [vmem:[%s1 + $0x14] sm:$0xf]
      %v189 = vld [vmem:[%s1 + $0x18] sm:$0xf]
      %v190 = vld [vmem:[%s1 + $0x1c] sm:$0xf]
      %v191 = vld [vmem:[%s1 + $0x20] sm:$0xf]
      %v192 = vld [vmem:[%s1 + $0x24] sm:$0xf]
      %v193 = vld [vmem:[%s1 + $0x28] sm:$0xf]
      %v194 = vld [vmem:[%s1 + $0x2c] sm:$0xf]
      %v195 = vld [vmem:[%s1 + $0x30] sm:$0xf]
      %v196 = vld [vmem:[%s1 + $0x34] sm:$0xf]
      %v197 = vld [vmem:[%s1 + $0x38] sm:$0xf]
      %v198 = vld [vmem:[%s1 + $0x3c] sm:$0xf]
      %v207 = vunpack.c.l.b16 %v175
      %v208 = vunpack.c.l.b16 %v176
      %v209 = vunpack.c.l.b16 %v177
      %v210 = vunpack.c.l.b16 %v178
      %v211 = vunpack.c.l.b16 %v179
      %v212 = vunpack.c.l.b16 %v180
      %v213 = vunpack.c.l.b16 %v181
      %v214 = vunpack.c.l.b16 %v182
      %v215 = vpack.c.b16 %v208, %v207
      %v216 = vpack.c.b16 %v210, %v209
      %v217 = vpack.c.b16 %v212, %v211
      %v218 = vpack.c.b16 %v214, %v213
      %v239 = vunpack.c.l.b16 %v183
      %v240 = vunpack.c.l.b16 %v184
      %v241 = vunpack.c.l.b16 %v185
      %v242 = vunpack.c.l.b16 %v186
      %v243 = vunpack.c.l.b16 %v187
      %v244 = vunpack.c.l.b16 %v188
      %v245 = vunpack.c.l.b16 %v189
      %v246 = vunpack.c.l.b16 %v190
      %v247 = vunpack.c.l.b16 %v191
      %v248 = vunpack.c.l.b16 %v192
      %v249 = vunpack.c.l.b16 %v193
      %v250 = vunpack.c.l.b16 %v194
      %v251 = vunpack.c.l.b16 %v195
      %v252 = vunpack.c.l.b16 %v196
      %v253 = vunpack.c.l.b16 %v197
      %v254 = vunpack.c.l.b16 %v198
      %v255 = vpack.c.b16 %v240, %v239
      %v256 = vpack.c.b16 %v242, %v241
      %v257 = vpack.c.b16 %v244, %v243
      %v258 = vpack.c.b16 %v246, %v245
      %v259 = vpack.c.b16 %v248, %v247
      %v260 = vpack.c.b16 %v250, %v249
      %v261 = vpack.c.b16 %v252, %v251
      %v262 = vpack.c.b16 %v254, %v253
      %271 = vmatprep.subr.bf16.mxu0 0
      %272 = vmatpush1.bf16.msra.mxu0 %v262
      %273 = vmatprep.subr.bf16.mxu0 0
      %274 = vmatpush1.bf16.msra.mxu0 %v261
      %275 = vmatprep.subr.bf16.mxu0 0
      %276 = vmatpush1.bf16.msra.mxu0 %v260
      %277 = vmatprep.subr.bf16.mxu0 0
      %278 = vmatpush1.bf16.msra.mxu0 %v259
      %279 = vmatprep.subr.bf16.mxu0 0
      %280 = vmatpush1.bf16.msra.mxu0 %v258
      %281 = vmatprep.subr.bf16.mxu0 0
      %282 = vmatpush1.bf16.msra.mxu0 %v257
      %283 = vmatprep.subr.bf16.mxu0 0
      %284 = vmatpush1.bf16.msra.mxu0 %v256
      %285 = vmatprep.subr.bf16.mxu0 0
      %286 = vmatpush1.bf16.msra.mxu0 %v255
      %287 = vmatprep.subr.bf16.mxu0 0
      %288 = vmatpush2.bf16.msra.mxu0 0
      %289 = vmatprep.subr.bf16.mxu0 0
      %290 = vmatpush2.bf16.msra.mxu0 0
      %291 = vmatprep.subr.bf16.mxu0 0
      %292 = vmatpush2.bf16.msra.mxu0 0
      %293 = vmatprep.subr.bf16.mxu0 0
      %294 = vmatpush2.bf16.msra.mxu0 0
      %295 = vmatprep.subr.bf16.mxu0 0
      %296 = vmatpush2.bf16.msra.mxu0 0
      %297 = vmatprep.subr.bf16.mxu0 0
      %298 = vmatpush2.bf16.msra.mxu0 0
      %299 = vmatprep.subr.bf16.mxu0 0
      %300 = vmatpush2.bf16.msra.mxu0 0
      %301 = vmatprep.subr.bf16.mxu0 0
      %302 = vmatpush2.bf16.msra.mxu0 0
      %303 = vmatprep.mubr.bf16.mxu0 0
      %304 = vmatmul.mubr.bf16.gmra.mxu0 %v215
      %v305 = vpop.f32.mrf.mxu0
      %v306 = vadd.f32 0.0, %v305
      %v307 = vpop.f32.mrf.mxu0
      %v308 = vpop.f32.mrf.mxu0
      %v309 = vadd.f32 0.0, %v308
      %v310 = vpop.f32.mrf.mxu0
      %311 = vmatprep.mubr.bf16.mxu0 0
      %312 = vmatmul.mubr.bf16.gmra.mxu0 %v216
      %v313 = vpop.f32.mrf.mxu0
      %v314 = vadd.f32 0.0, %v313
      %v315 = vpop.f32.mrf.mxu0
      %v316 = vpop.f32.mrf.mxu0
      %v317 = vadd.f32 0.0, %v316
      %v318 = vpop.f32.mrf.mxu0
      %319 = vmatprep.mubr.bf16.mxu0 0
      %320 = vmatmul.mubr.bf16.gmra.mxu0 %v217
      %v321 = vpop.f32.mrf.mxu0
      %v322 = vadd.f32 0.0, %v321
      %v323 = vpop.f32.mrf.mxu0
      %v324 = vpop.f32.mrf.mxu0
      %v325 = vadd.f32 0.0, %v324
      %v326 = vpop.f32.mrf.mxu0
      %327 = vmatprep.mubr.bf16.mxu0 0
      %328 = vmatmul.mubr.bf16.gmra.mxu0 %v218
      %v329 = vpop.f32.mrf.mxu0
      %v330 = vadd.f32 0.0, %v329
      %v331 = vpop.f32.mrf.mxu0
      %v332 = vpop.f32.mrf.mxu0
      %v333 = vadd.f32 0.0, %v332
      %v334 = vpop.f32.mrf.mxu0
      %335 = vdwg.mxu0
      %v336 = vmax.f32 %v306, 0.0
      %v337 = vmax.f32 %v309, 0.0
      %v338 = vmax.f32 %v314, 0.0
      %v339 = vmax.f32 %v317, 0.0
      %v340 = vmax.f32 %v322, 0.0
      %v341 = vmax.f32 %v325, 0.0
      %v342 = vmax.f32 %v330, 0.0
      %v343 = vmax.f32 %v333, 0.0
      %v344 = vpack.c.bf16 %v337, %v336
      %v345 = vpack.c.bf16 %v339, %v338
      %v346 = vpack.c.bf16 %v341, %v340
      %v347 = vpack.c.bf16 %v343, %v342
      %v348 = vld [vmem:[%s2] sm:$0xf]
      %v349 = vld [vmem:[%s2 + $0x4] sm:$0xf]
      %v352 = vunpack.c.l.b16 %v348
      %v353 = vunpack.c.l.b16 %v349
      %v354 = vpack.c.b16 %v353, %v352
      %vm356 = vcmask 130048
      %v358 = vsel %vm356, %v344, 0
      %v361 = vsel %vm356, %v345, 0
      %v364 = vsel %vm356, %v346, 0
      %v367 = vsel %vm356, %v347, 0
      %369 = vmatprep.subr.bf16.mxu0 0
      %370 = vmatpush1.bf16.msra.mxu0 0
      %371 = vmatprep.subr.bf16.mxu0 0
      %372 = vmatpush1.bf16.msra.mxu0 0
      %373 = vmatprep.subr.bf16.mxu0 0
      %374 = vmatpush1.bf16.msra.mxu0 0
      %375 = vmatprep.subr.bf16.mxu0 0
      %376 = vmatpush1.bf16.msra.mxu0 0
      %377 = vmatprep.subr.bf16.mxu0 0
      %378 = vmatpush1.bf16.msra.mxu0 0
      %379 = vmatprep.subr.bf16.mxu0 0
      %380 = vmatpush1.bf16.msra.mxu0 0
      %381 = vmatprep.subr.bf16.mxu0 0
      %382 = vmatpush1.bf16.msra.mxu0 0
      %383 = vmatprep.subr.bf16.mxu0 0
      %384 = vmatpush1.bf16.msra.mxu0 %v354
      %385 = vmatprep.subr.bf16.mxu0 0
      %386 = vmatpush2.bf16.msra.mxu0 0
      %387 = vmatprep.subr.bf16.mxu0 0
      %388 = vmatpush2.bf16.msra.mxu0 0
      %389 = vmatprep.subr.bf16.mxu0 0
      %390 = vmatpush2.bf16.msra.mxu0 0
      %391 = vmatprep.subr.bf16.mxu0 0
      %392 = vmatpush2.bf16.msra.mxu0 0
      %393 = vmatprep.subr.bf16.mxu0 0
      %394 = vmatpush2.bf16.msra.mxu0 0
      %395 = vmatprep.subr.bf16.mxu0 0
      %396 = vmatpush2.bf16.msra.mxu0 0
      %397 = vmatprep.subr.bf16.mxu0 0
      %398 = vmatpush2.bf16.msra.mxu0 0
      %399 = vmatprep.subr.bf16.mxu0 0
      %400 = vmatpush2.bf16.msra.mxu0 0
      %401 = vmatprep.mubr.bf16.mxu0 0
      %402 = vmatmul.mubr.bf16.gmra.mxu0 %v358
      %v403 = vpop.f32.mrf.mxu0
      %v404 = vadd.f32 0.0, %v403
      %v405 = vpop.f32.mrf.mxu0
      %v406 = vpop.f32.mrf.mxu0
      %v407 = vadd.f32 0.0, %v406
      %v408 = vpop.f32.mrf.mxu0
      %409 = vmatprep.mubr.bf16.mxu0 0
      %410 = vmatmul.mubr.bf16.gmra.mxu0 %v361
      %v411 = vpop.f32.mrf.mxu0
      %v412 = vadd.f32 0.0, %v411
      %v413 = vpop.f32.mrf.mxu0
      %v414 = vpop.f32.mrf.mxu0
      %v415 = vadd.f32 0.0, %v414
      %v416 = vpop.f32.mrf.mxu0
      %417 = vmatprep.mubr.bf16.mxu0 0
      %418 = vmatmul.mubr.bf16.gmra.mxu0 %v364
      %v419 = vpop.f32.mrf.mxu0
      %v420 = vadd.f32 0.0, %v419
      %v421 = vpop.f32.mrf.mxu0
      %v422 = vpop.f32.mrf.mxu0
      %v423 = vadd.f32 0.0, %v422
      %v424 = vpop.f32.mrf.mxu0
      %425 = vmatprep.mubr.bf16.mxu0 0
      %426 = vmatmul.mubr.bf16.gmra.mxu0 %v367
      %v427 = vpop.f32.mrf.mxu0
      %v428 = vadd.f32 0.0, %v427
      %v429 = vpop.f32.mrf.mxu0
      %v430 = vpop.f32.mrf.mxu0
      %v431 = vadd.f32 0.0, %v430
      %v432 = vpop.f32.mrf.mxu0
      %433 = vdwg.mxu0
      %v434 = vpack.c.bf16 %v407, %v404
      %v435 = vpack.c.bf16 %v415, %v412
      %v436 = vpack.c.bf16 %v423, %v420
      %v437 = vpack.c.bf16 %v431, %v428
      %v442 = vunpack.c.l.b16 %v434
      %v443 = vunpack.c.h.b16 %v434
      %v444 = vunpack.c.l.b16 %v435
      %v445 = vunpack.c.h.b16 %v435
      %v446 = vunpack.c.l.b16 %v436
      %v447 = vunpack.c.h.b16 %v436
      %v448 = vunpack.c.l.b16 %v437
      %v449 = vunpack.c.h.b16 %v437
      %v450 = vpack.c.b16 %v442, %v442
      %v451 = vpack.c.b16 %v443, %v443
      %v452 = vpack.c.b16 %v444, %v444
      %v453 = vpack.c.b16 %v445, %v445
      %v454 = vpack.c.b16 %v446, %v446
      %v455 = vpack.c.b16 %v447, %v447
      %v456 = vpack.c.b16 %v448, %v448
      %v457 = vpack.c.b16 %v449, %v449
      %466 = vst [vmem:[%s172] sm:$0xf] %v450
      %467 = vst [vmem:[%s172 + $0x4] sm:$0xf] %v451
      %468 = vst [vmem:[%s172 + $0x8] sm:$0xf] %v452
      %469 = vst [vmem:[%s172 + $0xc] sm:$0xf] %v453
      %470 = vst [vmem:[%s172 + $0x10] sm:$0xf] %v454
      %471 = vst [vmem:[%s172 + $0x14] sm:$0xf] %v455
      %472 = vst [vmem:[%s172 + $0x18] sm:$0xf] %v456
      %473 = vst [vmem:[%s172 + $0x1c] sm:$0xf] %v457
      %s474 = smul.u32 8, %s14
      %p475 = scmp.lt.s32.totalorder %s474, 15
      %s476 = scalar_select %p475, %s474, 15
      %s477 = smul.addr %s476, 4
      %s478 = scalar_lea.vmem %s3, %s477
      // Predicated region
      $region33: #{unet_block_innermost_forward.3} parent=31 // pred_check
        %p479 = pneg %p100
      $region34: #{unet_block_innermost_forward.3} parent=31 // pred_check_branch
        %481 = sbr.rel (%p479) target = $region36
      $region35: #{unet_block_innermost_forward.3} parent=31 // pred_region
        %s482 = smul.u32 8, %s14
      $region36: #{unet_block_innermost_forward.3} parent=31 // pred_fallthru
        _
    $region32: #{unet_block_innermost_forward.3} parent=5 // pred_fallthru
      _
    %p483 = scmp.le.s32.totalorder 2, %s9
    // Predicated region
    $region37: #{unet_block_innermost_forward.3} parent=5 // pred_check
      %p484 = pneg %p483
    $region38: #{unet_block_innermost_forward.3} parent=5 // pred_check_branch
      %486 = sbr.rel (%p484) target = $region40
    $region39: #{unet_block_innermost_forward.3} parent=5 // pred_region
      %s487 = ssub.s32 %s9, 2
      // Predicated region
      $region41: #{unet_block_innermost_forward.3} parent=39 // pred_check
        %p488 = pneg %p106
      $region42: #{unet_block_innermost_forward.3} parent=39 // pred_check_branch
        %490 = sbr.rel (%p488) target = $region44
      $region43: #{unet_block_innermost_forward.3} parent=39 // pred_region
        %s491 = smul.u32 8, %s15
        %p492 = scmp.lt.s32.totalorder %s491, 15
        %s493 = scalar_select %p492, %s491, 15
        %s494 = smul.addr %s493, 4
        %s495 = scalar_lea.vmem %s3, %s494
      $region44: #{unet_block_innermost_forward.3} parent=39 // pred_fallthru
        _
    $region40: #{unet_block_innermost_forward.3} parent=5 // pred_fallthru
      _
  $region6: #{unet_block_innermost_forward.3} parent=0 // loop_footer
    %s13 = sadd.s32 1, %s9
  $region7: #{unet_block_innermost_forward.3} parent=0 // loop_footer_branch
    %8 = sbr.rel target = $region3
  $region8: #{unet_block_innermost_forward.3} parent=0 // loop_exit
    _

// kernel: unet_block_innermost_forward.4
$region0: #{unet_block_innermost_forward.4}
  #allocation0 [shape = 'u32[]', space=smem, size = 0x4, offset = 0x4, fixed_abs, tag = 'smem constant byte address 0x4 - core index']
  #allocation1 [shape = 'u32[144,128]{1,0:T(1,128)}', space=vmem, size = 0x12000, scoped, tag = 'internal scratch']
  %s0 = inlined_call_operand.vmem [shape: f32[16,256], index: 0, kind: input, shape index: {}]
  %s1 = inlined_call_operand.vmem [shape: f32[16,1], index: 1, kind: output, shape index: {0}]
  %s2 = inlined_call_operand.vmem [shape: f32[16,1], index: 2, kind: output, shape index: {1}]
  %3 = xla_tuple %s1, %s2
  %s4 = sld [smem:[#allocation0]]
  $region45: #{unet_block_innermost_forward.4} parent=0
    _
  %s6 = ssub.s32 1, %s4
  %s7 = scalar_select 0, %s6, %s4
  loop: start=0, step=1, limit=4
  $region2: #{unet_block_innermost_forward.4} parent=0 // loop_pre_header
    _
  $region3: #{unet_block_innermost_forward.4} parent=0 // loop_header
    %s9 = sphi 0, %s13
    %p10 = scmp.ge.s32.totalorder %s9, 4
    %s19 = sphi 0, %s21
    %s22 = sphi 0, %s19
    %s23 = sphi 0, %s22
    %s39 = sphi 0, %s23
    %s45 = sphi 0, %s47
    %s48 = sphi 0, %s45
    %s49 = sphi 0, %s48
    %s65 = sphi 0, %s49
    %s71 = sphi 0, %s73
    %s74 = sphi 0, %s71
    %s75 = sphi 0, %s74
    %s91 = sphi 0, %s75
  $region4: #{unet_block_innermost_forward.4} parent=0 // loop_header_branch
    %12 = sbr.rel (%p10) target = $region8
  $region5: #{unet_block_innermost_forward.4} parent=0 // loop_body
    %s14 = ssub.s32 %s9, 1
    %s15 = ssub.s32 %s9, 2
    %s16 = sadd.s32 %s9, 1
    %s17 = ssub.s32 %s9, %s16
    %p18 = scmp.eq.s32.totalorder %s17, 0
    %s20 = sadd.s32 %s19, 1
    %s21 = scalar_select %p18, %s19, %s20
    %p24 = pneg %p18
    %p25 = scmp.eq.s32.totalorder %s9, 1
    %p26 = por %p24, %p25
    %p27 = scmp.ne.s32.totalorder %s19, %s22
    %p28 = scmp.eq.s32.totalorder %s9, 0
    %p29 = por %p27, %p28
    %p30 = scmp.ne.s32.totalorder %s19, %s22
    %p31 = scmp.eq.s32.totalorder %s14, 1
    %p32 = por %p30, %p31
    %p33 = scmp.ne.s32.totalorder %s22, %s23
    %p34 = scmp.eq.s32.totalorder %s14, 0
    %p35 = por %p33, %p34
    %p36 = scmp.ne.s32.totalorder %s22, %s23
    %p37 = scmp.eq.s32.totalorder %s15, 1
    %p38 = por %p36, %p37
    %p40 = scmp.ne.s32.totalorder %s23, %s39
    %p41 = scmp.eq.s32.totalorder %s15, 0
    %p42 = por %p40, %p41
    %s43 = ssub.s32 %s9, %s16
    %p44 = scmp.eq.s32.totalorder %s43, 0
    %s46 = sadd.s32 %s45, 1
    %s47 = scalar_select %p44, %s45, %s46
    %p50 = pneg %p44
    %p51 = scmp.eq.s32.totalorder %s9, 1
    %p52 = por %p50, %p51
    %p53 = scmp.ne.s32.totalorder %s45, %s48
    %p54 = scmp.eq.s32.totalorder %s9, 0
    %p55 = por %p53, %p54
    %p56 = scmp.ne.s32.totalorder %s45, %s48
    %p57 = scmp.eq.s32.totalorder %s14, 1
    %p58 = por %p56, %p57
    %p59 = scmp.ne.s32.totalorder %s48, %s49
    %p60 = scmp.eq.s32.totalorder %s14, 0
    %p61 = por %p59, %p60
    %p62 = scmp.ne.s32.totalorder %s48, %s49
    %p63 = scmp.eq.s32.totalorder %s15, 1
    %p64 = por %p62, %p63
    %p66 = scmp.ne.s32.totalorder %s49, %s65
    %p67 = scmp.eq.s32.totalorder %s15, 0
    %p68 = por %p66, %p67
    %s69 = ssub.s32 %s9, %s16
    %p70 = scmp.eq.s32.totalorder %s69, 0
    %s72 = sadd.s32 %s71, 1
    %s73 = scalar_select %p70, %s71, %s72
    %p76 = pneg %p70
    %p77 = scmp.eq.s32.totalorder %s9, 1
    %p78 = por %p76, %p77
    %p79 = scmp.ne.s32.totalorder %s71, %s74
    %p80 = scmp.eq.s32.totalorder %s9, 0
    %p81 = por %p79, %p80
    %p82 = scmp.ne.s32.totalorder %s71, %s74
    %p83 = scmp.eq.s32.totalorder %s14, 1
    %p84 = por %p82, %p83
    %p85 = scmp.ne.s32.totalorder %s74, %s75
    %p86 = scmp.eq.s32.totalorder %s14, 0
    %p87 = por %p85, %p86
    %p88 = scmp.ne.s32.totalorder %s74, %s75
    %p89 = scmp.eq.s32.totalorder %s15, 1
    %p90 = por %p88, %p89
    %p92 = scmp.ne.s32.totalorder %s75, %s91
    %p93 = scmp.eq.s32.totalorder %s15, 0
    %p94 = por %p92, %p93
    %p95 = scmp.le.s32.totalorder 1, %s9
    %p96 = scmp.lt.s32.totalorder %s9, 3
    %p97 = pnand %p95, %p96
    %p98 = pneg %p97
    // Predicated region
    $region9: #{unet_block_innermost_forward.4} parent=5 // pred_check
      _
    $region10: #{unet_block_innermost_forward.4} parent=5 // pred_check_branch
      %100 = sbr.rel (%p97) target = $region12
    $region11: #{unet_block_innermost_forward.4} parent=5 // pred_region
      %s101 = ssub.s32 %s9, 1
    $region12: #{unet_block_innermost_forward.4} parent=5 // pred_fallthru
      _
    %p102 = scmp.lt.s32.totalorder %s9, 2
    // Predicated region
    $region13: #{unet_block_innermost_forward.4} parent=5 // pred_check
      %p103 = pneg %p102
    $region14: #{unet_block_innermost_forward.4} parent=5 // pred_check_branch
      %105 = sbr.rel (%p103) target = $region16
    $region15: #{unet_block_innermost_forward.4} parent=5 // pred_region
      // Predicated region
      $region17: #{unet_block_innermost_forward.4} parent=15 // pred_check
        %p106 = pneg %p29
      $region18: #{unet_block_innermost_forward.4} parent=15 // pred_check_branch
        %108 = sbr.rel (%p106) target = $region20
      $region19: #{unet_block_innermost_forward.4} parent=15 // pred_region
        %p109 = scmp.lt.s32.totalorder %s9, 1
        %s110 = scalar_select %p109, %s9, 1
        %s111 = smul.addr %s110, 2
        %s112 = smul.addr %s111, 8
        %s113 = scalar_lea.vmem %s0, %s112
      $region20: #{unet_block_innermost_forward.4} parent=15 // pred_fallthru
        _
    $region16: #{unet_block_innermost_forward.4} parent=5 // pred_fallthru
      _
    %p114 = scmp.le.s32.totalorder 1, %s9
    %p115 = scmp.lt.s32.totalorder %s9, 3
    %p116 = pnand %p114, %p115
    %p117 = pneg %p116
    // Predicated region
    $region21: #{unet_block_innermost_forward.4} parent=5 // pred_check
      _
    $region22: #{unet_block_innermost_forward.4} parent=5 // pred_check_branch
      %119 = sbr.rel (%p116) target = $region24
    $region23: #{unet_block_innermost_forward.4} parent=5 // pred_region
      %s120 = ssub.s32 %s9, 1
      %p121 = scmp.lt.s32.totalorder %s14, 1
      %s122 = scalar_select %p121, %s14, 1
      %s123 = smul.addr %s122, 2
      %s124 = smul.addr %s123, 8
      %s125 = scalar_lea.vmem %s0, %s124
      %p126 = pneg %p35
      %p127 = pneg %p32
      %p128 = pneg %p61
      %p129 = pneg %p58
      %p130 = scmp.lt.s32.totalorder %s14, 1
      %s131 = scalar_select %p130, %s14, 1
      %s132 = smul.addr %s131, 8
      %s133 = scalar_lea.vmem %s1, %s132
      %p134 = pneg %p87
      %p135 = pneg %p84
      %p136 = scmp.lt.s32.totalorder %s14, 1
      %s137 = scalar_select %p136, %s14, 1
      %s138 = smul.addr %s137, 8
      %s139 = scalar_lea.vmem %s2, %s138
      %p140 = scmp.lt.s32.totalorder %s14, 1
      %s141 = scalar_select %p140, %s14, 1
      %s142 = smul.addr %s141, 2
      %s143 = smul.addr %s142, 8
      %s144 = scalar_lea.vmem %s0, %s143
      %p145 = scmp.lt.s32.totalorder %s14, 1
      %s146 = scalar_select %p145, %s14, 1
      %s147 = smul.addr %s146, 8
      %s148 = scalar_lea.vmem %s1, %s147
      %p149 = scmp.lt.s32.totalorder %s14, 1
      %s150 = scalar_select %p149, %s14, 1
      %s151 = smul.addr %s150, 8
      %s152 = scalar_lea.vmem %s2, %s151
      %v153 = vld [vmem:[%s144] sm:$0xff]
      %v154 = vld [vmem:[%s144 + $0x8] sm:$0xff]
      %v155 = vadd.f32 %v153, %v154
      %156 = vadd.xlane.f32.xlu0 %v155
      %v157 = vpop.xlane.xlu0 %156
      %vm158 = vcmask 7168
      %159 = vst.msk [vmem:[%s148] sm:$0xff] %vm158, %v157
      %v160 = vmul.f32 %v153, %v153
      %v161 = vmul.f32 %v154, %v154
      %v162 = vadd.f32 %v160, %v161
      %163 = vadd.xlane.f32.xlu0 %v162
      %v164 = vpop.xlane.xlu0 %163
      %165 = vst.msk [vmem:[%s152] sm:$0xff] %vm158, %v164
      %p166 = scmp.lt.s32.totalorder %s14, 1
      %s167 = scalar_select %p166, %s14, 1
      %s168 = smul.addr %s167, 8
      %s169 = scalar_lea.vmem %s1, %s168
      %p170 = scmp.lt.s32.totalorder %s14, 1
      %s171 = scalar_select %p170, %s14, 1
      %s172 = smul.addr %s171, 8
      %s173 = scalar_lea.vmem %s2, %s172
      // Predicated region
      $region25: #{unet_block_innermost_forward.4} parent=23 // pred_check
        %p174 = pneg %p58
      $region26: #{unet_block_innermost_forward.4} parent=23 // pred_check_branch
        %176 = sbr.rel (%p174) target = $region28
      $region27: #{unet_block_innermost_forward.4} parent=23 // pred_region
        _
      $region28: #{unet_block_innermost_forward.4} parent=23 // pred_fallthru
        _
      // Predicated region
      $region29: #{unet_block_innermost_forward.4} parent=23 // pred_check
        %p177 = pneg %p84
      $region30: #{unet_block_innermost_forward.4} parent=23 // pred_check_branch
        %179 = sbr.rel (%p177) target = $region32
      $region31: #{unet_block_innermost_forward.4} parent=23 // pred_region
        _
      $region32: #{unet_block_innermost_forward.4} parent=23 // pred_fallthru
        _
    $region24: #{unet_block_innermost_forward.4} parent=5 // pred_fallthru
      _
    %p180 = scmp.le.s32.totalorder 2, %s9
    // Predicated region
    $region33: #{unet_block_innermost_forward.4} parent=5 // pred_check
      %p181 = pneg %p180
    $region34: #{unet_block_innermost_forward.4} parent=5 // pred_check_branch
      %183 = sbr.rel (%p181) target = $region36
    $region35: #{unet_block_innermost_forward.4} parent=5 // pred_region
      %s184 = ssub.s32 %s9, 2
      // Predicated region
      $region37: #{unet_block_innermost_forward.4} parent=35 // pred_check
        %p185 = pneg %p64
      $region38: #{unet_block_innermost_forward.4} parent=35 // pred_check_branch
        %187 = sbr.rel (%p185) target = $region40
      $region39: #{unet_block_innermost_forward.4} parent=35 // pred_region
        %p188 = scmp.lt.s32.totalorder %s15, 1
        %s189 = scalar_select %p188, %s15, 1
        %s190 = smul.addr %s189, 8
        %s191 = scalar_lea.vmem %s1, %s190
      $region40: #{unet_block_innermost_forward.4} parent=35 // pred_fallthru
        _
      // Predicated region
      $region41: #{unet_block_innermost_forward.4} parent=35 // pred_check
        %p192 = pneg %p90
      $region42: #{unet_block_innermost_forward.4} parent=35 // pred_check_branch
        %194 = sbr.rel (%p192) target = $region44
      $region43: #{unet_block_innermost_forward.4} parent=35 // pred_region
        %p195 = scmp.lt.s32.totalorder %s15, 1
        %s196 = scalar_select %p195, %s15, 1
        %s197 = smul.addr %s196, 8
        %s198 = scalar_lea.vmem %s2, %s197
      $region44: #{unet_block_innermost_forward.4} parent=35 // pred_fallthru
        _
    $region36: #{unet_block_innermost_forward.4} parent=5 // pred_fallthru
      _
  $region6: #{unet_block_innermost_forward.4} parent=0 // loop_footer
    %s13 = sadd.s32 1, %s9
  $region7: #{unet_block_innermost_forward.4} parent=0 // loop_footer_branch
    %8 = sbr.rel target = $region3
  $region8: #{unet_block_innermost_forward.4} parent=0 // loop_exit
    _

// kernel: unet_block_innermost_forward.5
$region0: #{unet_block_innermost_forward.5}
  #allocation0 [shape = 'u32[]', space=smem, size = 0x4, offset = 0x4, fixed_abs, tag = 'smem constant byte address 0x4 - core index']
  #allocation1 [shape = 'u32[144,128]{1,0:T(1,128)}', space=vmem, size = 0x12000, scoped, tag = 'internal scratch']
  %s0 = inlined_call_operand.vmem [shape: f32[16,256], index: 0, kind: input, shape index: {}]
  %s1 = inlined_call_operand.vmem [shape: f32[16,256], index: 1, kind: input, shape index: {}]
  %s2 = inlined_call_operand.vmem [shape: f32[8,1], index: 2, kind: input, shape index: {}]
  %s3 = inlined_call_operand.vmem [shape: f32[8,1], index: 3, kind: input, shape index: {}]
  %s4 = inlined_call_operand.vmem [shape: f32[32,256], index: 4, kind: output, shape index: {}]
  %s5 = sld [smem:[#allocation0]]
  $region49: #{unet_block_innermost_forward.5} parent=0
    _
  %s7 = ssub.s32 1, %s5
  %s8 = scalar_select 0, %s7, %s5
  loop: start=0, step=1, limit=4
  $region2: #{unet_block_innermost_forward.5} parent=0 // loop_pre_header
    _
  $region3: #{unet_block_innermost_forward.5} parent=0 // loop_header
    %s10 = sphi 0, %s14
    %p11 = scmp.ge.s32.totalorder %s10, 4
    %s20 = sphi 0, %s22
    %s23 = sphi 0, %s20
    %s24 = sphi 0, %s23
    %s40 = sphi 0, %s24
    %s46 = sphi 0, %s48
    %s49 = sphi 0, %s46
    %s50 = sphi 0, %s49
    %s66 = sphi 0, %s50
    %s70 = sphi 0, %s70
    %s72 = sphi 0, %s70
    %s73 = sphi 0, %s72
    %s87 = sphi 0, %s73
    %s91 = sphi 0, %s91
    %s93 = sphi 0, %s91
    %s94 = sphi 0, %s93
    %s108 = sphi 0, %s94
    %s114 = sphi 0, %s116
    %s117 = sphi 0, %s114
    %s118 = sphi 0, %s117
    %s134 = sphi 0, %s118
  $region4: #{unet_block_innermost_forward.5} parent=0 // loop_header_branch
    %13 = sbr.rel (%p11) target = $region8
  $region5: #{unet_block_innermost_forward.5} parent=0 // loop_body
    %s15 = ssub.s32 %s10, 1
    %s16 = ssub.s32 %s10, 2
    %s17 = sadd.s32 %s10, 1
    %s18 = ssub.s32 %s10, %s17
    %p19 = scmp.eq.s32.totalorder %s18, 0
    %s21 = sadd.s32 %s20, 1
    %s22 = scalar_select %p19, %s20, %s21
    %p25 = pneg %p19
    %p26 = scmp.eq.s32.totalorder %s10, 1
    %p27 = por %p25, %p26
    %p28 = scmp.ne.s32.totalorder %s20, %s23
    %p29 = scmp.eq.s32.totalorder %s10, 0
    %p30 = por %p28, %p29
    %p31 = scmp.ne.s32.totalorder %s20, %s23
    %p32 = scmp.eq.s32.totalorder %s15, 1
    %p33 = por %p31, %p32
    %p34 = scmp.ne.s32.totalorder %s23, %s24
    %p35 = scmp.eq.s32.totalorder %s15, 0
    %p36 = por %p34, %p35
    %p37 = scmp.ne.s32.totalorder %s23, %s24
    %p38 = scmp.eq.s32.totalorder %s16, 1
    %p39 = por %p37, %p38
    %p41 = scmp.ne.s32.totalorder %s24, %s40
    %p42 = scmp.eq.s32.totalorder %s16, 0
    %p43 = por %p41, %p42
    %s44 = ssub.s32 %s10, %s17
    %p45 = scmp.eq.s32.totalorder %s44, 0
    %s47 = sadd.s32 %s46, 1
    %s48 = scalar_select %p45, %s46, %s47
    %p51 = pneg %p45
    %p52 = scmp.eq.s32.totalorder %s10, 1
    %p53 = por %p51, %p52
    %p54 = scmp.ne.s32.totalorder %s46, %s49
    %p55 = scmp.eq.s32.totalorder %s10, 0
    %p56 = por %p54, %p55
    %p57 = scmp.ne.s32.totalorder %s46, %s49
    %p58 = scmp.eq.s32.totalorder %s15, 1
    %p59 = por %p57, %p58
    %p60 = scmp.ne.s32.totalorder %s49, %s50
    %p61 = scmp.eq.s32.totalorder %s15, 0
    %p62 = por %p60, %p61
    %p63 = scmp.ne.s32.totalorder %s49, %s50
    %p64 = scmp.eq.s32.totalorder %s16, 1
    %p65 = por %p63, %p64
    %p67 = scmp.ne.s32.totalorder %s50, %s66
    %p68 = scmp.eq.s32.totalorder %s16, 0
    %p69 = por %p67, %p68
    %s71 = sadd.s32 %s70, 1
    %p74 = scmp.eq.s32.totalorder %s10, 1
    %p75 = scmp.ne.s32.totalorder %s70, %s72
    %p76 = scmp.eq.s32.totalorder %s10, 0
    %p77 = por %p75, %p76
    %p78 = scmp.ne.s32.totalorder %s70, %s72
    %p79 = scmp.eq.s32.totalorder %s15, 1
    %p80 = por %p78, %p79
    %p81 = scmp.ne.s32.totalorder %s72, %s73
    %p82 = scmp.eq.s32.totalorder %s15, 0
    %p83 = por %p81, %p82
    %p84 = scmp.ne.s32.totalorder %s72, %s73
    %p85 = scmp.eq.s32.totalorder %s16, 1
    %p86 = por %p84, %p85
    %p88 = scmp.ne.s32.totalorder %s73, %s87
    %p89 = scmp.eq.s32.totalorder %s16, 0
    %p90 = por %p88, %p89
    %s92 = sadd.s32 %s91, 1
    %p95 = scmp.eq.s32.totalorder %s10, 1
    %p96 = scmp.ne.s32.totalorder %s91, %s93
    %p97 = scmp.eq.s32.totalorder %s10, 0
    %p98 = por %p96, %p97
    %p99 = scmp.ne.s32.totalorder %s91, %s93
    %p100 = scmp.eq.s32.totalorder %s15, 1
    %p101 = por %p99, %p100
    %p102 = scmp.ne.s32.totalorder %s93, %s94
    %p103 = scmp.eq.s32.totalorder %s15, 0
    %p104 = por %p102, %p103
    %p105 = scmp.ne.s32.totalorder %s93, %s94
    %p106 = scmp.eq.s32.totalorder %s16, 1
    %p107 = por %p105, %p106
    %p109 = scmp.ne.s32.totalorder %s94, %s108
    %p110 = scmp.eq.s32.totalorder %s16, 0
    %p111 = por %p109, %p110
    %s112 = ssub.s32 %s10, %s17
    %p113 = scmp.eq.s32.totalorder %s112, 0
    %s115 = sadd.s32 %s114, 1
    %s116 = scalar_select %p113, %s114, %s115
    %p119 = pneg %p113
    %p120 = scmp.eq.s32.totalorder %s10, 1
    %p121 = por %p119, %p120
    %p122 = scmp.ne.s32.totalorder %s114, %s117
    %p123 = scmp.eq.s32.totalorder %s10, 0
    %p124 = por %p122, %p123
    %p125 = scmp.ne.s32.totalorder %s114, %s117
    %p126 = scmp.eq.s32.totalorder %s15, 1
    %p127 = por %p125, %p126
    %p128 = scmp.ne.s32.totalorder %s117, %s118
    %p129 = scmp.eq.s32.totalorder %s15, 0
    %p130 = por %p128, %p129
    %p131 = scmp.ne.s32.totalorder %s117, %s118
    %p132 = scmp.eq.s32.totalorder %s16, 1
    %p133 = por %p131, %p132
    %p135 = scmp.ne.s32.totalorder %s118, %s134
    %p136 = scmp.eq.s32.totalorder %s16, 0
    %p137 = por %p135, %p136
    %p138 = scmp.le.s32.totalorder 1, %s10
    %p139 = scmp.lt.s32.totalorder %s10, 3
    %p140 = pnand %p138, %p139
    %p141 = pneg %p140
    // Predicated region
    $region9: #{unet_block_innermost_forward.5} parent=5 // pred_check
      _
    $region10: #{unet_block_innermost_forward.5} parent=5 // pred_check_branch
      %143 = sbr.rel (%p140) target = $region12
    $region11: #{unet_block_innermost_forward.5} parent=5 // pred_region
      %s144 = ssub.s32 %s10, 1
      // Predicated region
      $region13: #{unet_block_innermost_forward.5} parent=11 // pred_check
        %p145 = pneg %p83
      $region14: #{unet_block_innermost_forward.5} parent=11 // pred_check_branch
        %147 = sbr.rel (%p145) target = $region16
      $region15: #{unet_block_innermost_forward.5} parent=11 // pred_region
        _
      $region16: #{unet_block_innermost_forward.5} parent=11 // pred_fallthru
        _
      // Predicated region
      $region17: #{unet_block_innermost_forward.5} parent=11 // pred_check
        %p148 = pneg %p104
      $region18: #{unet_block_innermost_forward.5} parent=11 // pred_check_branch
        %150 = sbr.rel (%p148) target = $region20
      $region19: #{unet_block_innermost_forward.5} parent=11 // pred_region
        _
      $region20: #{unet_block_innermost_forward.5} parent=11 // pred_fallthru
        _
    $region12: #{unet_block_innermost_forward.5} parent=5 // pred_fallthru
      _
    %p151 = scmp.lt.s32.totalorder %s10, 2
    // Predicated region
    $region21: #{unet_block_innermost_forward.5} parent=5 // pred_check
      %p152 = pneg %p151
    $region22: #{unet_block_innermost_forward.5} parent=5 // pred_check_branch
      %154 = sbr.rel (%p152) target = $region24
    $region23: #{unet_block_innermost_forward.5} parent=5 // pred_region
      // Predicated region
      $region25: #{unet_block_innermost_forward.5} parent=23 // pred_check
        %p155 = pneg %p30
      $region26: #{unet_block_innermost_forward.5} parent=23 // pred_check_branch
        %157 = sbr.rel (%p155) target = $region28
      $region27: #{unet_block_innermost_forward.5} parent=23 // pred_region
        %p158 = scmp.lt.s32.totalorder %s10, 1
        %s159 = scalar_select %p158, %s10, 1
        %s160 = smul.addr %s159, 2
        %s161 = smul.addr %s160, 8
        %s162 = scalar_lea.vmem %s0, %s161
      $region28: #{unet_block_innermost_forward.5} parent=23 // pred_fallthru
        _
      // Predicated region
      $region29: #{unet_block_innermost_forward.5} parent=23 // pred_check
        %p163 = pneg %p56
      $region30: #{unet_block_innermost_forward.5} parent=23 // pred_check_branch
        %165 = sbr.rel (%p163) target = $region32
      $region31: #{unet_block_innermost_forward.5} parent=23 // pred_region
        %p166 = scmp.lt.s32.totalorder %s10, 1
        %s167 = scalar_select %p166, %s10, 1
        %s168 = smul.addr %s167, 2
        %s169 = smul.addr %s168, 8
        %s170 = scalar_lea.vmem %s1, %s169
      $region32: #{unet_block_innermost_forward.5} parent=23 // pred_fallthru
        _
    $region24: #{unet_block_innermost_forward.5} parent=5 // pred_fallthru
      _
    %p171 = scmp.le.s32.totalorder 1, %s10
    %p172 = scmp.lt.s32.totalorder %s10, 3
    %p173 = pnand %p171, %p172
    %p174 = pneg %p173
    // Predicated region
    $region33: #{unet_block_innermost_forward.5} parent=5 // pred_check
      _
    $region34: #{unet_block_innermost_forward.5} parent=5 // pred_check_branch
      %176 = sbr.rel (%p173) target = $region36
    $region35: #{unet_block_innermost_forward.5} parent=5 // pred_region
      %s177 = ssub.s32 %s10, 1
      %p178 = scmp.lt.s32.totalorder %s15, 1
      %s179 = scalar_select %p178, %s15, 1
      %s180 = smul.addr %s179, 2
      %s181 = smul.addr %s180, 8
      %s182 = scalar_lea.vmem %s0, %s181
      %p183 = pneg %p36
      %p184 = pneg %p33
      %p185 = scmp.lt.s32.totalorder %s15, 1
      %s186 = scalar_select %p185, %s15, 1
      %s187 = smul.addr %s186, 2
      %s188 = smul.addr %s187, 8
      %s189 = scalar_lea.vmem %s1, %s188
      %p190 = pneg %p62
      %p191 = pneg %p59
      %p192 = pneg %p83
      %p193 = pneg %p80
      %p194 = pneg %p104
      %p195 = pneg %p101
      %p196 = pneg %p130
      %p197 = pneg %p127
      %s198 = smul.u32 2, %s15
      %p199 = scmp.lt.s32.totalorder %s198, 3
      %s200 = scalar_select %p199, %s198, 3
      %s201 = smul.addr %s200, 2
      %s202 = smul.addr %s201, 8
      %s203 = scalar_lea.vmem %s4, %s202
      %p204 = scmp.lt.s32.totalorder %s15, 1
      %s205 = scalar_select %p204, %s15, 1
      %s206 = smul.addr %s205, 2
      %s207 = smul.addr %s206, 8
      %s208 = scalar_lea.vmem %s0, %s207
      %p209 = scmp.lt.s32.totalorder %s15, 1
      %s210 = scalar_select %p209, %s15, 1
      %s211 = smul.addr %s210, 2
      %s212 = smul.addr %s211, 8
      %s213 = scalar_lea.vmem %s1, %s212
      %s214 = smul.u32 2, %s15
      %p215 = scmp.lt.s32.totalorder %s214, 3
      %s216 = scalar_select %p215, %s214, 3
      %s217 = smul.addr %s216, 2
      %s218 = smul.addr %s217, 8
      %s219 = scalar_lea.vmem %s4, %s218
      %s220 = smul.u32 2, %s15
      %v221 = vld [vmem:[%s208] sm:$0xff]
      %v222 = vld [vmem:[%s208 + $0x8] sm:$0xff]
      %223 = vst [vmem:[%s219] sm:$0xff] %v221
      %224 = vst [vmem:[%s219 + $0x8] sm:$0xff] %v222
      %v225 = vld [vmem:[%s213] sm:$0xff]
      %v226 = vld [vmem:[%s213 + $0x8] sm:$0xff]
      %v227 = vld [vmem:[%s2] sm:$0xff]
      %229 = vset.pattern.permute.xlu0 0
      %230 = vperm.xlu0 %229, %v227
      %v231 = vpop.permute.xlu0 %230
      %v233 = vmul.f32 %v225, %v231
      %v234 = vmul.f32 %v226, %v231
      %v235 = vld [vmem:[%s3] sm:$0xff]
      %237 = vset.pattern.permute.xlu0 0
      %238 = vperm.xlu0 %237, %v235
      %v239 = vpop.permute.xlu0 %238
      %v241 = vadd.f32 %v233, %v239
      %v242 = vadd.f32 %v234, %v239
      %243 = vst [vmem:[%s219 + $0x10] sm:$0xff] %v241
      %244 = vst [vmem:[%s219 + $0x18] sm:$0xff] %v242
      %s245 = smul.u32 2, %s15
      %p246 = scmp.lt.s32.totalorder %s245, 3
      %s247 = scalar_select %p246, %s245, 3
      %s248 = smul.addr %s247, 2
      %s249 = smul.addr %s248, 8
      %s250 = scalar_lea.vmem %s4, %s249
      // Predicated region
      $region37: #{unet_block_innermost_forward.5} parent=35 // pred_check
        %p251 = pneg %p127
      $region38: #{unet_block_innermost_forward.5} parent=35 // pred_check_branch
        %253 = sbr.rel (%p251) target = $region40
      $region39: #{unet_block_innermost_forward.5} parent=35 // pred_region
        %s254 = smul.u32 2, %s15
      $region40: #{unet_block_innermost_forward.5} parent=35 // pred_fallthru
        _
    $region36: #{unet_block_innermost_forward.5} parent=5 // pred_fallthru
      _
    %p255 = scmp.le.s32.totalorder 2, %s10
    // Predicated region
    $region41: #{unet_block_innermost_forward.5} parent=5 // pred_check
      %p256 = pneg %p255
    $region42: #{unet_block_innermost_forward.5} parent=5 // pred_check_branch
      %258 = sbr.rel (%p256) target = $region44
    $region43: #{unet_block_innermost_forward.5} parent=5 // pred_region
      %s259 = ssub.s32 %s10, 2
      // Predicated region
      $region45: #{unet_block_innermost_forward.5} parent=43 // pred_check
        %p260 = pneg %p133
      $region46: #{unet_block_innermost_forward.5} parent=43 // pred_check_branch
        %262 = sbr.rel (%p260) target = $region48
      $region47: #{unet_block_innermost_forward.5} parent=43 // pred_region
        %s263 = smul.u32 2, %s16
        %p264 = scmp.lt.s32.totalorder %s263, 3
        %s265 = scalar_select %p264, %s263, 3
        %s266 = smul.addr %s265, 2
        %s267 = smul.addr %s266, 8
        %s268 = scalar_lea.vmem %s4, %s267
      $region48: #{unet_block_innermost_forward.5} parent=43 // pred_fallthru
        _
    $region44: #{unet_block_innermost_forward.5} parent=5 // pred_fallthru
      _
  $region6: #{unet_block_innermost_forward.5} parent=0 // loop_footer
    %s14 = sadd.s32 1, %s10
  $region7: #{unet_block_innermost_forward.5} parent=0 // loop_footer_branch
    %9 = sbr.rel target = $region3
  $region8: #{unet_block_innermost_forward.5} parent=0 // loop_exit
    _

</llo_original>
